<compile_context>
chip_gen: v6e
topology: v6e:2x2x1
jax: 0.10.0
libtpu: 0.0.40
codegen_flags: <defaults>
</compile_context>

<pallas_src>
import jax
import jax.numpy as jnp
from jax.experimental import pallas as pl
from jax.experimental.pallas import tpu as pltpu


def _round_up(x, m):
    return (x + m - 1) // m * m


def _vmem_capacity_bytes():
    """Physical VMEM per TensorCore, with a conservative fallback (v7x: 64 MiB/TC)."""
    try:
        info = pltpu.get_tpu_info()
        for attr in ("vmem_capacity_bytes", "vmem_bytes", "vmem_capacity"):
            v = getattr(info, attr, None)
            if isinstance(v, int) and v > 0:
                return v
    except Exception:
        pass
    return 64 * 1024 * 1024


def cluster_loss(logits, *, tile_t=None):
    """logits: (T, K) array (f32 or bf16). Returns (L1, L2) f32 scalars, matching PyTorch."""
    T, K = logits.shape
    itemsize = jnp.dtype(logits.dtype).itemsize
    sublane = 8 * max(1, 4 // itemsize)          # 8 for f32, 16 for bf16, 32 for int8/fp8

    vmem_cap = _vmem_capacity_bytes()
    # Per-input-buffer cap: 16 MiB on 128 MiB parts (v5e/v6e), vmem_cap/5 (~12.8 MiB) on
    # 64 MiB-per-TC parts (v7x). Double-buffered input therefore stays well under capacity
    # while keeping DMAs long and grid steps few.
    tile_cap_bytes = min(16 * 1024 * 1024, vmem_cap // 5)

    if tile_t is None:
        max_rows = max(sublane,
                       (tile_cap_bytes // max(1, K * itemsize)) // sublane * sublane)
        tile_t = min(_round_up(T, sublane), max_rows)
    tile_t = max(sublane, (tile_t // sublane) * sublane)
    n_tiles = pl.cdiv(T, tile_t)
    ragged = (T % tile_t) != 0

    tile_bytes = tile_t * K * itemsize
    # Explicit scoped-VMEM limit: 2x double-buffered input + headroom for accumulators and
    # internal scratch, never above ~3/4 of physical VMEM, never below the 32 MiB default.
    vmem_limit_bytes = int(
        max(32 * 1024 * 1024,
            min(vmem_cap * 3 // 4, 2 * tile_bytes + 8 * 1024 * 1024)))

    def kernel(x_ref, out_ref, ent_acc, col_acc):
        i = pl.program_id(0)

        @pl.when(i == 0)
        def _init():
            ent_acc[...] = jnp.zeros_like(ent_acc)
            col_acc[...] = jnp.zeros_like(col_acc)

        x = x_ref[...].astype(jnp.float32)                        # (tile_t, K)

        def accumulate(x, valid=None):
            if valid is not None:
                x = jnp.where(valid, x, 0.0)                      # zero rows past T
            # Per-row entropy, reformulated:  H = log(s) - sum(e*z)/s
            m = jnp.max(x, axis=1, keepdims=True)                 # (tile_t, 1)
            z = x - m
            e = jnp.exp(z)                                        # EUP
            s = jnp.sum(e, axis=1, keepdims=True)                 # lane reduce (XLU)
            ez = jnp.sum(e * z, axis=1, keepdims=True)
            row_ent = jnp.log(s) - ez / s                         # (tile_t, 1)
            if valid is not None:
                row_ent = jnp.where(valid, row_ent, 0.0)
            # Scalar accumulate (no lane-sparse (tile_t,1) accumulator traffic).
            ent_acc[...] += jnp.sum(row_ent)
            # Running column-sum for mu (invalid rows already zeroed).
            col_acc[...] += jnp.sum(x, axis=0, keepdims=True)     # (1, K)

        if not ragged:
            accumulate(x)
        else:
            @pl.when(i < n_tiles - 1)
            def _full_tile():
                accumulate(x)

            @pl.when(i == n_tiles - 1)
            def _last_tile():
                row = i * tile_t + jax.lax.broadcasted_iota(jnp.int32, (tile_t, 1), 0)
                accumulate(x, valid=row < T)

        @pl.when(i == n_tiles - 1)
        def _finalize():
            inv_t = 1.0 / T
            l1 = jnp.sum(ent_acc[...]) * inv_t                    # mean over true batch size

            mu = col_acc[...] * inv_t                             # (1, K)
            mm = jnp.max(mu, axis=1, keepdims=True)
            zm = mu - mm
            em = jnp.exp(zm)
            sm = jnp.sum(em, axis=1, keepdims=True)
            ezm = jnp.sum(em * zm, axis=1, keepdims=True)
            # L2 = sum(pm * log pm) = sum(em*zm)/sm - log(sm)   (exact divide: runs once)
            l2 = jnp.sum(ezm / sm - jnp.log(sm))

            out_ref[0] = l1
            out_ref[1] = l2

    cost = pl.CostEstimate(
        flops=int(6 * T * K + 10 * K + 4 * T),
        transcendentals=int(T * K + 2 * T + K + 2),   # exp/log/div per row + finalize
        bytes_accessed=int(T * K * itemsize + 8),
    )

    out = pl.pallas_call(
        kernel,
        out_shape=jax.ShapeDtypeStruct((2,), jnp.float32),
        grid=(n_tiles,),
        in_specs=[pl.BlockSpec((tile_t, K), lambda i: (i, 0))],
        out_specs=pl.BlockSpec(memory_space=pltpu.MemorySpace.SMEM),
        scratch_shapes=[
            pltpu.VMEM((1, 1), jnp.float32),        # running scalar entropy accumulator
            pltpu.VMEM((1, K), jnp.float32),        # running column-sum for mu
        ],
        compiler_params=pltpu.CompilerParams(
            dimension_semantics=("arbitrary",),     # reduction axis (output resident)
            vmem_limit_bytes=vmem_limit_bytes),
        cost_estimate=cost,
    )(logits)
    return out[0], out[1]


def cluster_loss_ref(logits):
    # Pure-JAX reference (mirrors the PyTorch forward).
    x = logits.astype(jnp.float32)
    logp = jax.nn.log_softmax(x, axis=1)
    p = jnp.exp(logp)
    l1 = jnp.mean(-jnp.sum(p * logp, axis=1))
    mu = jnp.mean(x, axis=0)
    logpm = jax.nn.log_softmax(mu)
    pm = jnp.exp(logpm)
    l2 = jnp.sum(pm * logpm)
    return l1, l2


if __name__ == "__main__":
    key = jax.random.PRNGKey(0)
    T, K = 20, 128                      # small batch, K classes on the lane axis
    logits = jax.random.normal(key, (T, K), dtype=jnp.float32)
    l1_ref, l2_ref = cluster_loss_ref(logits)

    # Small tile to exercise the pipelined grid + ragged last tile (20 rows = 8 + 8 + 4).
    l1, l2 = cluster_loss(logits, tile_t=8)
    jax.block_until_ready((l1, l2))
    assert jnp.allclose(l1, l1_ref, atol=1e-3, rtol=1e-3), (l1, l1_ref)
    assert jnp.allclose(l2, l2_ref, atol=1e-3, rtol=1e-3), (l2, l2_ref)

    # Default (auto-sized, VMEM-capacity-aware) tile: single tile, no masking traced.
    l1d, l2d = cluster_loss(logits)
    jax.block_until_ready((l1d, l2d))
    assert jnp.allclose(l1d, l1_ref, atol=1e-3, rtol=1e-3), (l1d, l1_ref)
    assert jnp.allclose(l2d, l2_ref, atol=1e-3, rtol=1e-3), (l2d, l2_ref)

    # Exact multiple of the tile (no ragged branch) with a multi-step grid.
    logits32 = jax.random.normal(jax.random.PRNGKey(1), (32, K), dtype=jnp.float32)
    l1m, l2m = cluster_loss(logits32, tile_t=8)
    jax.block_until_ready((l1m, l2m))
    l1m_ref, l2m_ref = cluster_loss_ref(logits32)
    assert jnp.allclose(l1m, l1m_ref, atol=1e-3, rtol=1e-3), (l1m, l1m_ref)
    assert jnp.allclose(l2m, l2m_ref, atol=1e-3, rtol=1e-3), (l2m, l2m_ref)

    # bf16 ingress (halves HBM traffic; f32 upcast happens in-kernel). Note: quantizing the
    # logits to bf16 is a semantic change vs f32 logits — reference is fed the same bf16.
    logits_bf16 = logits.astype(jnp.bfloat16)
    l1b, l2b = cluster_loss(logits_bf16, tile_t=16)
    jax.block_until_ready((l1b, l2b))
    l1b_ref, l2b_ref = cluster_loss_ref(logits_bf16)
    assert jnp.allclose(l1b, l1b_ref, atol=1e-3, rtol=1e-3), (l1b, l1b_ref)
    assert jnp.allclose(l2b, l2b_ref, atol=1e-3, rtol=1e-3), (l2b, l2b_ref)

    print("KERNEL_OK")
</pallas_src>

<mosaic_0001>
module attributes {stable_mosaic.version = 11 : i64} {
  func.func @kernel(%arg0: i32, %arg1: memref<8x128xf32, #tpu.memory_space<vmem>>, %arg2: memref<2xf32, #tpu.memory_space<smem>>, %arg3: memref<1x1xf32, #tpu.memory_space<vmem>>, %arg4: memref<1x128xf32, #tpu.memory_space<vmem>>) attributes {dimension_semantics = [#tpu.dimension_semantics<arbitrary>], iteration_bounds = array<i64: 3>, scalar_prefetch = 0 : i64, scratch_operands = 2 : i64, tpu.core_type = #tpu.core_type<tc>, window_params = [{transform_indices = @transform_0, window_bounds = array<i64: 8, 128>}, {transform_indices = @transform_1, window_bounds = array<i64: 2>}]} {
    %c0_i32 = arith.constant 0 : i32
    %0 = arith.cmpi eq, %arg0, %c0_i32 : i32
    %1 = arith.extui %0 : i1 to i32
    %c0_i32_0 = arith.constant 0 : i32
    %2 = arith.cmpi ne, %1, %c0_i32_0 : i32
    scf.if %2 {
      %cst = arith.constant 0.000000e+00 : f32
      %13 = vector.broadcast %cst : f32 to vector<1x1xf32>
      %c0_7 = arith.constant 0 : index
      %c0_8 = arith.constant 0 : index
      %14 = vector.load %arg3[%c0_7, %c0_8] : memref<1x1xf32, #tpu.memory_space<vmem>>, vector<1x1xf32>
      tpu.vector_store %arg3[%c0_7, %c0_8], %13 {strides = array<i32>} : memref<1x1xf32, #tpu.memory_space<vmem>>, vector<1x1xf32>,
      %cst_9 = arith.constant 0.000000e+00 : f32
      %15 = vector.broadcast %cst_9 : f32 to vector<1x128xf32>
      %c0_10 = arith.constant 0 : index
      %c0_11 = arith.constant 0 : index
      %16 = vector.load %arg4[%c0_10, %c0_11] : memref<1x128xf32, #tpu.memory_space<vmem>>, vector<1x128xf32>
      tpu.vector_store %arg4[%c0_10, %c0_11], %15 {strides = array<i32>} : memref<1x128xf32, #tpu.memory_space<vmem>>, vector<1x128xf32>,
    } else {
    }
    %c0 = arith.constant 0 : index
    %c0_1 = arith.constant 0 : index
    %3 = vector.load %arg1[%c0, %c0_1] : memref<8x128xf32, #tpu.memory_space<vmem>>, vector<8x128xf32>
    %c2_i32 = arith.constant 2 : i32
    %4 = arith.cmpi slt, %arg0, %c2_i32 : i32
    %5 = arith.extui %4 : i1 to i32
    %c0_i32_2 = arith.constant 0 : i32
    %6 = arith.cmpi ne, %5, %c0_i32_2 : i32
    scf.if %6 {
      %cst = arith.constant dense<0xFF800000> : vector<8xf32>
      %13 = vector.multi_reduction <maximumf>, %3, %cst [1] : vector<8x128xf32> to vector<8xf32>
      %14 = vector.shape_cast %13 : vector<8xf32> to vector<8x1xf32>
      %15 = vector.broadcast %14 : vector<8x1xf32> to vector<8x128xf32>
      %16 = arith.subf %3, %15 : vector<8x128xf32>
      %17 = math.exp %16 : vector<8x128xf32>
      %cst_7 = arith.constant dense<0.000000e+00> : vector<8xf32>
      %18 = vector.multi_reduction <add>, %17, %cst_7 [1] : vector<8x128xf32> to vector<8xf32>
      %19 = vector.shape_cast %18 : vector<8xf32> to vector<8x1xf32>
      %20 = arith.mulf %17, %16 : vector<8x128xf32>
      %cst_8 = arith.constant dense<0.000000e+00> : vector<8xf32>
      %21 = vector.multi_reduction <add>, %20, %cst_8 [1] : vector<8x128xf32> to vector<8xf32>
      %22 = vector.shape_cast %21 : vector<8xf32> to vector<8x1xf32>
      %23 = math.log %19 : vector<8x1xf32>
      %24 = arith.divf %22, %19 : vector<8x1xf32>
      %25 = arith.subf %23, %24 : vector<8x1xf32>
      %c0_9 = arith.constant 0 : index
      %c0_10 = arith.constant 0 : index
      %26 = vector.load %arg3[%c0_9, %c0_10] : memref<1x1xf32, #tpu.memory_space<vmem>>, vector<1x1xf32>
      %27 = vector.shape_cast %25 : vector<8x1xf32> to vector<1x8x1xf32>
      %cst_11 = arith.constant dense<0.000000e+00> : vector<1xf32>
      %28 = vector.multi_reduction <add>, %27, %cst_11 [1, 2] : vector<1x8x1xf32> to vector<1xf32>
      %29 = vector.shape_cast %28 : vector<1xf32> to vector<1x1x1xf32>
      %30 = vector.extract %29[0, 0, 0] : f32 from vector<1x1x1xf32>
      %31 = vector.broadcast %30 : f32 to vector<1x1xf32>
      %32 = arith.addf %26, %31 : vector<1x1xf32>
      %c0_12 = arith.constant 0 : index
      %c0_13 = arith.constant 0 : index
      %33 = vector.load %arg3[%c0_12, %c0_13] : memref<1x1xf32, #tpu.memory_space<vmem>>, vector<1x1xf32>
      tpu.vector_store %arg3[%c0_12, %c0_13], %32 {strides = array<i32>} : memref<1x1xf32, #tpu.memory_space<vmem>>, vector<1x1xf32>,
      %c0_14 = arith.constant 0 : index
      %c0_15 = arith.constant 0 : index
      %34 = vector.load %arg4[%c0_14, %c0_15] : memref<1x128xf32, #tpu.memory_space<vmem>>, vector<1x128xf32>
      %cst_16 = arith.constant dense<0.000000e+00> : vector<128xf32>
      %35 = vector.multi_reduction <add>, %3, %cst_16 [0] : vector<8x128xf32> to vector<128xf32>
      %36 = vector.shape_cast %35 : vector<128xf32> to vector<1x128xf32>
      %37 = arith.addf %34, %36 : vector<1x128xf32>
      %c0_17 = arith.constant 0 : index
      %c0_18 = arith.constant 0 : index
      %38 = vector.load %arg4[%c0_17, %c0_18] : memref<1x128xf32, #tpu.memory_space<vmem>>, vector<1x128xf32>
      tpu.vector_store %arg4[%c0_17, %c0_18], %37 {strides = array<i32>} : memref<1x128xf32, #tpu.memory_space<vmem>>, vector<1x128xf32>,
    } else {
    }
    %c2_i32_3 = arith.constant 2 : i32
    %7 = arith.cmpi eq, %arg0, %c2_i32_3 : i32
    %8 = arith.extui %7 : i1 to i32
    %c0_i32_4 = arith.constant 0 : i32
    %9 = arith.cmpi ne, %8, %c0_i32_4 : i32
    scf.if %9 {
      %c8_i32 = arith.constant 8 : i32
      %13 = arith.muli %arg0, %c8_i32 : i32
      %14 = tpu.iota {dimensions = array<i32: 0>} : vector<8x1xi32>
      %15 = vector.broadcast %13 : i32 to vector<8x1xi32>
      %16 = arith.addi %15, %14 : vector<8x1xi32>
      %c20_i32 = arith.constant 20 : i32
      %17 = vector.broadcast %c20_i32 : i32 to vector<8x1xi32>
      %18 = arith.cmpi slt, %16, %17 : vector<8x1xi32>
      %cst = arith.constant 0.000000e+00 : f32
      %19 = vector.shape_cast %18 : vector<8x1xi1> to vector<8x1xi1>
      %20 = vector.broadcast %19 : vector<8x1xi1> to vector<8x128xi1>
      %21 = vector.broadcast %cst : f32 to vector<8x128xf32>
      %22 = arith.select %20, %3, %21 : vector<8x128xi1>, vector<8x128xf32>
      %cst_7 = arith.constant dense<0xFF800000> : vector<8xf32>
      %23 = vector.multi_reduction <maximumf>, %22, %cst_7 [1] : vector<8x128xf32> to vector<8xf32>
      %24 = vector.shape_cast %23 : vector<8xf32> to vector<8x1xf32>
      %25 = vector.broadcast %24 : vector<8x1xf32> to vector<8x128xf32>
      %26 = arith.subf %22, %25 : vector<8x128xf32>
      %27 = math.exp %26 : vector<8x128xf32>
      %cst_8 = arith.constant dense<0.000000e+00> : vector<8xf32>
      %28 = vector.multi_reduction <add>, %27, %cst_8 [1] : vector<8x128xf32> to vector<8xf32>
      %29 = vector.shape_cast %28 : vector<8xf32> to vector<8x1xf32>
      %30 = arith.mulf %27, %26 : vector<8x128xf32>
      %cst_9 = arith.constant dense<0.000000e+00> : vector<8xf32>
      %31 = vector.multi_reduction <add>, %30, %cst_9 [1] : vector<8x128xf32> to vector<8xf32>
      %32 = vector.shape_cast %31 : vector<8xf32> to vector<8x1xf32>
      %33 = math.log %29 : vector<8x1xf32>
      %34 = arith.divf %32, %29 : vector<8x1xf32>
      %35 = arith.subf %33, %34 : vector<8x1xf32>
      %cst_10 = arith.constant 0.000000e+00 : f32
      %36 = vector.broadcast %cst_10 : f32 to vector<8x1xf32>
      %37 = arith.select %18, %35, %36 : vector<8x1xi1>, vector<8x1xf32>
      %c0_11 = arith.constant 0 : index
      %c0_12 = arith.constant 0 : index
      %38 = vector.load %arg3[%c0_11, %c0_12] : memref<1x1xf32, #tpu.memory_space<vmem>>, vector<1x1xf32>
      %39 = vector.shape_cast %37 : vector<8x1xf32> to vector<1x8x1xf32>
      %cst_13 = arith.constant dense<0.000000e+00> : vector<1xf32>
      %40 = vector.multi_reduction <add>, %39, %cst_13 [1, 2] : vector<1x8x1xf32> to vector<1xf32>
      %41 = vector.shape_cast %40 : vector<1xf32> to vector<1x1x1xf32>
      %42 = vector.extract %41[0, 0, 0] : f32 from vector<1x1x1xf32>
      %43 = vector.broadcast %42 : f32 to vector<1x1xf32>
      %44 = arith.addf %38, %43 : vector<1x1xf32>
      %c0_14 = arith.constant 0 : index
      %c0_15 = arith.constant 0 : index
      %45 = vector.load %arg3[%c0_14, %c0_15] : memref<1x1xf32, #tpu.memory_space<vmem>>, vector<1x1xf32>
      tpu.vector_store %arg3[%c0_14, %c0_15], %44 {strides = array<i32>} : memref<1x1xf32, #tpu.memory_space<vmem>>, vector<1x1xf32>,
      %c0_16 = arith.constant 0 : index
      %c0_17 = arith.constant 0 : index
      %46 = vector.load %arg4[%c0_16, %c0_17] : memref<1x128xf32, #tpu.memory_space<vmem>>, vector<1x128xf32>
      %cst_18 = arith.constant dense<0.000000e+00> : vector<128xf32>
      %47 = vector.multi_reduction <add>, %22, %cst_18 [0] : vector<8x128xf32> to vector<128xf32>
      %48 = vector.shape_cast %47 : vector<128xf32> to vector<1x128xf32>
      %49 = arith.addf %46, %48 : vector<1x128xf32>
      %c0_19 = arith.constant 0 : index
      %c0_20 = arith.constant 0 : index
      %50 = vector.load %arg4[%c0_19, %c0_20] : memref<1x128xf32, #tpu.memory_space<vmem>>, vector<1x128xf32>
      tpu.vector_store %arg4[%c0_19, %c0_20], %49 {strides = array<i32>} : memref<1x128xf32, #tpu.memory_space<vmem>>, vector<1x128xf32>,
    } else {
    }
    %c2_i32_5 = arith.constant 2 : i32
    %10 = arith.cmpi eq, %arg0, %c2_i32_5 : i32
    %11 = arith.extui %10 : i1 to i32
    %c0_i32_6 = arith.constant 0 : i32
    %12 = arith.cmpi ne, %11, %c0_i32_6 : i32
    scf.if %12 {
      %c0_7 = arith.constant 0 : index
      %c0_8 = arith.constant 0 : index
      %13 = vector.load %arg3[%c0_7, %c0_8] : memref<1x1xf32, #tpu.memory_space<vmem>>, vector<1x1xf32>
      %14 = vector.shape_cast %13 : vector<1x1xf32> to vector<1x1x1xf32>
      %cst = arith.constant dense<0.000000e+00> : vector<1xf32>
      %15 = vector.multi_reduction <add>, %14, %cst [1, 2] : vector<1x1x1xf32> to vector<1xf32>
      %16 = vector.shape_cast %15 : vector<1xf32> to vector<1x1x1xf32>
      %17 = vector.extract %16[0, 0, 0] : f32 from vector<1x1x1xf32>
      %cst_9 = arith.constant 5.000000e-02 : f32
      %18 = arith.mulf %17, %cst_9 : f32
      %c0_10 = arith.constant 0 : index
      %c0_11 = arith.constant 0 : index
      %19 = vector.load %arg4[%c0_10, %c0_11] : memref<1x128xf32, #tpu.memory_space<vmem>>, vector<1x128xf32>
      %cst_12 = arith.constant 5.000000e-02 : f32
      %20 = vector.broadcast %cst_12 : f32 to vector<1x128xf32>
      %21 = arith.mulf %19, %20 : vector<1x128xf32>
      %cst_13 = arith.constant dense<0xFF800000> : vector<1xf32>
      %22 = vector.multi_reduction <maximumf>, %21, %cst_13 [1] : vector<1x128xf32> to vector<1xf32>
      %23 = vector.shape_cast %22 : vector<1xf32> to vector<1x1xf32>
      %24 = vector.broadcast %23 : vector<1x1xf32> to vector<1x128xf32>
      %25 = arith.subf %21, %24 : vector<1x128xf32>
      %26 = math.exp %25 : vector<1x128xf32>
      %cst_14 = arith.constant dense<0.000000e+00> : vector<1xf32>
      %27 = vector.multi_reduction <add>, %26, %cst_14 [1] : vector<1x128xf32> to vector<1xf32>
      %28 = vector.shape_cast %27 : vector<1xf32> to vector<1x1xf32>
      %29 = arith.mulf %26, %25 : vector<1x128xf32>
      %cst_15 = arith.constant dense<0.000000e+00> : vector<1xf32>
      %30 = vector.multi_reduction <add>, %29, %cst_15 [1] : vector<1x128xf32> to vector<1xf32>
      %31 = vector.shape_cast %30 : vector<1xf32> to vector<1x1xf32>
      %32 = arith.divf %31, %28 : vector<1x1xf32>
      %33 = math.log %28 : vector<1x1xf32>
      %34 = arith.subf %32, %33 : vector<1x1xf32>
      %35 = vector.shape_cast %34 : vector<1x1xf32> to vector<1x1x1xf32>
      %cst_16 = arith.constant dense<0.000000e+00> : vector<1xf32>
      %36 = vector.multi_reduction <add>, %35, %cst_16 [1, 2] : vector<1x1x1xf32> to vector<1xf32>
      %37 = vector.shape_cast %36 : vector<1xf32> to vector<1x1x1xf32>
      %38 = vector.extract %37[0, 0, 0] : f32 from vector<1x1x1xf32>
      %c0_17 = arith.constant 0 : index
      %39 = memref.load %arg2[%c0_17] : memref<2xf32, #tpu.memory_space<smem>>
      memref.store %18, %arg2[%c0_17] : memref<2xf32, #tpu.memory_space<smem>>
      %c1 = arith.constant 1 : index
      %40 = memref.load %arg2[%c1] : memref<2xf32, #tpu.memory_space<smem>>
      memref.store %38, %arg2[%c1] : memref<2xf32, #tpu.memory_space<smem>>
    } else {
    }
    return
  }
  func.func @transform_0(%arg0: i32) -> (i32, i32) {
    %c0_i32 = arith.constant 0 : i32
    %c0_i32_0 = arith.constant 0 : i32
    return %arg0, %c0_i32 : i32, i32
  }
  func.func @transform_1(%arg0: i32) -> i32 {
    %c0_i32 = arith.constant 0 : i32
    %c0_i32_0 = arith.constant 0 : i32
    return %c0_i32 : i32
  }
}

</mosaic_0001>

<llo_original>
// kernel: tpu_custom_call.1
$region0: #{tpu_custom_call.1}
  #allocation0 [shape = 'u32[]', space=smem, size = 0x4, offset = 0x4, fixed_abs, tag = 'smem constant byte address 0x4 - core index']
  #allocation1 [shape = 'u32[144,128]{1,0:T(1,128)}', space=vmem, size = 0x12000, scoped, tag = 'internal scratch']
  #allocation2 [shape = 'f32[1,1]{1,0:T(1,128)}', space=vmem, size = 0x200, scoped, tag = 'scratch operand']
  #allocation3 [shape = 'f32[1,128]{1,0:T(1,128)}', space=vmem, size = 0x200, scoped, tag = 'scratch operand']
  %s0 = inlined_call_operand.hbm [shape: f32[20,128], index: 0, kind: input, shape index: {}]
  %s1 = inlined_call_operand.hbm [shape: f32[2], index: 1, kind: output, shape index: {}]
  %s2 = sld [smem:[#allocation0]]
  $region53: #{tpu_custom_call.1} parent=0
    _
  %s4 = ssub.s32 1, %s2
  %s5 = scalar_select 0, %s4, %s2
  $region1: #{tpu_custom_call.1} parent=0
    #allocation4 [shape = 'u8[8192]{0}', space=vmem, size = 0x2000, scoped, tag = 'input window, operand 0']
    #allocation5 [shape = 's32[2]{0}', space=sflag, size = 0x8, scoped, tag = 'scoped memory for tpu_custom_call.1']
    #allocation6 [shape = 's32[2]{0}', space=sflag, size = 0x8, scoped, tag = 'scoped memory for tpu_custom_call.1']
    #allocation7 [shape = 'u8[512]{0}', space=smem, size = 0x200, scoped, tag = 'output window, operand 0, single buffered']
    %6 = vsyncpa [#allocation5], 0
    %s7 = scalar_lea.sflag [#allocation5], 1
    %8 = vsyncpa %s7, 0
    %9 = vsyncpa [#allocation6], 0
    loop: start=0, step=1, limit=5
    $region2: #{tpu_custom_call.1} parent=1 // loop_pre_header
      _
    $region3: #{tpu_custom_call.1} parent=1 // loop_header
      %s11 = sphi 0, %s15
      %p12 = scmp.ge.s32.totalorder %s11, 5
      %s21 = sphi 0, %s23
      %s24 = sphi 0, %s21
      %s25 = sphi 0, %s24
      %s41 = sphi 0, %s25
      %s45 = sphi 0, %s45
      %s47 = sphi 0, %s45
      %s48 = sphi 0, %s47
      %s62 = sphi 0, %s48
    $region4: #{tpu_custom_call.1} parent=1 // loop_header_branch
      %14 = sbr.rel (%p12) target = $region8
    $region5: #{tpu_custom_call.1} parent=1 // loop_body
      %s16 = ssub.s32 %s11, 1
      %s17 = ssub.s32 %s11, 2
      %s18 = sadd.s32 %s11, 1
      %s19 = ssub.s32 %s11, %s18
      %p20 = scmp.eq.s32.totalorder %s19, 0
      %s22 = sadd.s32 %s21, 1
      %s23 = scalar_select %p20, %s21, %s22
      %p26 = pneg %p20
      %p27 = scmp.eq.s32.totalorder %s11, 2
      %p28 = por %p26, %p27
      %p29 = scmp.ne.s32.totalorder %s21, %s24
      %p30 = scmp.eq.s32.totalorder %s11, 0
      %p31 = por %p29, %p30
      %p32 = scmp.ne.s32.totalorder %s21, %s24
      %p33 = scmp.eq.s32.totalorder %s16, 2
      %p34 = por %p32, %p33
      %p35 = scmp.ne.s32.totalorder %s24, %s25
      %p36 = scmp.eq.s32.totalorder %s16, 0
      %p37 = por %p35, %p36
      %p38 = scmp.ne.s32.totalorder %s24, %s25
      %p39 = scmp.eq.s32.totalorder %s17, 2
      %p40 = por %p38, %p39
      %p42 = scmp.ne.s32.totalorder %s25, %s41
      %p43 = scmp.eq.s32.totalorder %s17, 0
      %p44 = por %p42, %p43
      %s46 = sadd.s32 %s45, 1
      %p49 = scmp.eq.s32.totalorder %s11, 2
      %p50 = scmp.ne.s32.totalorder %s45, %s47
      %p51 = scmp.eq.s32.totalorder %s11, 0
      %p52 = por %p50, %p51
      %p53 = scmp.ne.s32.totalorder %s45, %s47
      %p54 = scmp.eq.s32.totalorder %s16, 2
      %p55 = por %p53, %p54
      %p56 = scmp.ne.s32.totalorder %s47, %s48
      %p57 = scmp.eq.s32.totalorder %s16, 0
      %p58 = por %p56, %p57
      %p59 = scmp.ne.s32.totalorder %s47, %s48
      %p60 = scmp.eq.s32.totalorder %s17, 2
      %p61 = por %p59, %p60
      %p63 = scmp.ne.s32.totalorder %s48, %s62
      %p64 = scmp.eq.s32.totalorder %s17, 0
      %p65 = por %p63, %p64
      %p66 = scmp.le.s32.totalorder 1, %s11
      %p67 = scmp.lt.s32.totalorder %s11, 4
      %p68 = pnand %p66, %p67
      %p69 = pneg %p68
      // Predicated region
      $region9: #{tpu_custom_call.1} parent=5 // pred_check
        _
      $region10: #{tpu_custom_call.1} parent=5 // pred_check_branch
        %71 = sbr.rel (%p68) target = $region12
      $region11: #{tpu_custom_call.1} parent=5 // pred_region
        %s72 = ssub.s32 %s11, 1
      $region12: #{tpu_custom_call.1} parent=5 // pred_fallthru
        _
      %p73 = scmp.lt.s32.totalorder %s11, 3
      // Predicated region
      $region13: #{tpu_custom_call.1} parent=5 // pred_check
        %p74 = pneg %p73
      $region14: #{tpu_custom_call.1} parent=5 // pred_check_branch
        %76 = sbr.rel (%p74) target = $region16
      $region15: #{tpu_custom_call.1} parent=5 // pred_region
        // Predicated region
        $region17: #{tpu_custom_call.1} parent=15 // pred_check
          %p77 = pneg %p31
        $region18: #{tpu_custom_call.1} parent=15 // pred_check_branch
          %79 = sbr.rel (%p77) target = $region20
        $region19: #{tpu_custom_call.1} parent=15 // pred_region
          %s80 = sand.u32 %s21, 1
          %s81 = scalar_lea.sflag [#allocation5], %s80
          %s82 = sand.u32 %s21, 1
          %s83 = smul.addr %s82, 8
          %s84 = scalar_lea.vmem [#allocation4], %s83
          %s86 = ssub.s32 128, 128
          %87 = vsyncadd %s81, %s86
          %s88 = smul.addr %s11, 128
          %s89 = scalar_lea.hbm %s0, %s88
          %s91 = sshll.u32 %s84, 4
          %s92 = int_to_ptr.vmem [resolvable:$true] %s91
          %94 = dma.hbm_to_vmem [thread:$0]  %s89, 128, %s92, %s81
        $region20: #{tpu_custom_call.1} parent=15 // pred_fallthru
          _
      $region16: #{tpu_custom_call.1} parent=5 // pred_fallthru
        _
      %p95 = scmp.le.s32.totalorder 1, %s11
      %p96 = scmp.lt.s32.totalorder %s11, 4
      %p97 = pnand %p95, %p96
      %p98 = pneg %p97
      // Predicated region
      $region21: #{tpu_custom_call.1} parent=5 // pred_check
        _
      $region22: #{tpu_custom_call.1} parent=5 // pred_check_branch
        %100 = sbr.rel (%p97) target = $region24
      $region23: #{tpu_custom_call.1} parent=5 // pred_region
        %s101 = ssub.s32 %s11, 1
        %s102 = sand.u32 %s24, 1
        %s103 = scalar_lea.sflag [#allocation5], %s102
        %s104 = sand.u32 %s24, 1
        %s105 = smul.addr %s104, 8
        %s106 = scalar_lea.vmem [#allocation4], %s105
        // Predicated region
        $region25: #{tpu_custom_call.1} parent=23 // pred_check
          %p107 = pneg %p37
        $region26: #{tpu_custom_call.1} parent=23 // pred_check_branch
          %109 = sbr.rel (%p107) target = $region28
        $region27: #{tpu_custom_call.1} parent=23 // pred_region
          %110 = dma.done %s103, 128
        $region28: #{tpu_custom_call.1} parent=23 // pred_fallthru
          _
        %s111 = sand.u32 %s24, 1
        %s112 = scalar_lea.sflag [#allocation5], %s111
        %s113 = sand.u32 %s24, 1
        %s114 = smul.addr %s113, 8
        %s115 = scalar_lea.vmem [#allocation4], %s114
        %p116 = pneg %p37
        %p117 = pneg %p34
        %p118 = pneg %p58
        %p119 = pneg %p55
        %p120 = scmp.eq.s32.totalorder %s16, 0
        // Predicated region
        $region29: #{tpu_custom_call.1} parent=23 // pred_check
          %p121 = pneg %p120
        $region30: #{tpu_custom_call.1} parent=23 // pred_check_branch
          %123 = sbr.rel (%p121) target = $region32
        $region31: #{tpu_custom_call.1} parent=23 // pred_region
          %vm124 = vcmask 0
          %125 = vst.msk [vmem:[#allocation2] sm:$0x1] %vm124, 0.0
          %126 = vst [vmem:[#allocation3] sm:$0x1] 0.0
        $region32: #{tpu_custom_call.1} parent=23 // pred_fallthru
          _
        %v127 = vld [vmem:[%s106] sm:$0xff]
        %p128 = scmp.lt.s32.totalorder %s16, 2
        // Predicated region
        $region33: #{tpu_custom_call.1} parent=23 // pred_check
          %p129 = pneg %p128
        $region34: #{tpu_custom_call.1} parent=23 // pred_check_branch
          %131 = sbr.rel (%p129) target = $region36
        $region35: #{tpu_custom_call.1} parent=23 // pred_region
          %132 = vmax.xlane.f32.xlu0 %v127
          %v133 = vpop.xlane.xlu0 %132
          %v134 = vsub.f32 %v127, %v133
          %v135 = vmul.f32 %v134, 1.442695
          %v136 = vpow.pop %v135
          %137 = vadd.xlane.f32.xlu0 %v136
          %v138 = vpop.xlane.xlu0 %137
          %v139 = vmul.f32 %v136, %v134
          %140 = vadd.xlane.f32.xlu0 %v139
          %v141 = vpop.xlane.xlu0 %140
          %v142 = vlog2.pop %v138
          %v143 = vmul.f32 %v142, 0.6931472
          %v144 = vrcp.pop %v138
          %v145 = vmul.f32 %v141, %v144
          %v146 = vsub.f32 %v143, %v145
          %v147 = vld [vmem:[#allocation2] sm:$0x1]
          %vm148 = vcmask 7168
          %v149 = vsel %vm148, %v146, 0.0
          %150 = vadd.xlane.f32.xlu0 %v149
          %v151 = vpop.xlane.xlu0 %150
          %v152 = vrot.slane %v151, 4
          %v153 = vadd.f32 %v151, %v152
          %v154 = vrot.slane %v153, 2
          %v155 = vadd.f32 %v153, %v154
          %v156 = vrot.slane %v155, 1
          %v157 = vadd.f32 %v155, %v156
          %s158 = vtos %v157
          %v159 = vstv %s158
          %v160 = vadd.f32 %v147, %v159
          %vm161 = vcmask 0
          %162 = vst.msk [vmem:[#allocation2] sm:$0x1] %vm161, %v160
          %v163 = vld [vmem:[#allocation3] sm:$0x1]
          %v164 = vrot.slane %v127, 4
          %v165 = vadd.f32 %v127, %v164
          %v166 = vrot.slane %v165, 2
          %v167 = vadd.f32 %v165, %v166
          %v168 = vrot.slane %v167, 1
          %v169 = vadd.f32 %v167, %v168
          %v170 = vadd.f32 %v163, %v169
          %171 = vst [vmem:[#allocation3] sm:$0x1] %v170
        $region36: #{tpu_custom_call.1} parent=23 // pred_fallthru
          _
        %p172 = scmp.eq.s32.totalorder %s16, 2
        // Predicated region
        $region37: #{tpu_custom_call.1} parent=23 // pred_check
          %p173 = pneg %p172
        $region38: #{tpu_custom_call.1} parent=23 // pred_check_branch
          %175 = sbr.rel (%p173) target = $region40
        $region39: #{tpu_custom_call.1} parent=23 // pred_region
          %s176 = smul.u32 %s16, 8
          %v177 = vlaneseq
          %v178 = vshrl.u32 %v177, 7
          %v179 = vstv %s176
          %v180 = vadd.s32 %v179, %v178
          %vm181 = vcmp.lt.s32.totalorder %v180, 20
          %v182 = vsel %vm181, 1, 0
          %vm183 = vcmp.eq.s32.totalorder %v182, 1
          %v184 = vsel %vm183, %v127, 0.0
          %185 = vmax.xlane.f32.xlu0 %v184
          %v186 = vpop.xlane.xlu0 %185
          %v187 = vsub.f32 %v184, %v186
          %v188 = vmul.f32 %v187, 1.442695
          %v189 = vpow.pop %v188
          %190 = vadd.xlane.f32.xlu0 %v189
          %v191 = vpop.xlane.xlu0 %190
          %v192 = vmul.f32 %v189, %v187
          %193 = vadd.xlane.f32.xlu0 %v192
          %v194 = vpop.xlane.xlu0 %193
          %v195 = vlog2.pop %v191
          %v196 = vmul.f32 %v195, 0.6931472
          %v197 = vrcp.pop %v191
          %v198 = vmul.f32 %v194, %v197
          %v199 = vsub.f32 %v196, %v198
          %v200 = vsel %vm181, %v199, 0.0
          %v201 = vld [vmem:[#allocation2] sm:$0x1]
          %vm202 = vcmask 7168
          %v203 = vsel %vm202, %v200, 0.0
          %204 = vadd.xlane.f32.xlu0 %v203
          %v205 = vpop.xlane.xlu0 %204
          %v206 = vrot.slane %v205, 4
          %v207 = vadd.f32 %v205, %v206
          %v208 = vrot.slane %v207, 2
          %v209 = vadd.f32 %v207, %v208
          %v210 = vrot.slane %v209, 1
          %v211 = vadd.f32 %v209, %v210
          %s212 = vtos %v211
          %v213 = vstv %s212
          %v214 = vadd.f32 %v201, %v213
          %vm215 = vcmask 0
          %216 = vst.msk [vmem:[#allocation2] sm:$0x1] %vm215, %v214
          %v217 = vld [vmem:[#allocation3] sm:$0x1]
          %v218 = vrot.slane %v184, 4
          %v219 = vadd.f32 %v184, %v218
          %v220 = vrot.slane %v219, 2
          %v221 = vadd.f32 %v219, %v220
          %v222 = vrot.slane %v221, 1
          %v223 = vadd.f32 %v221, %v222
          %v224 = vadd.f32 %v217, %v223
          %225 = vst [vmem:[#allocation3] sm:$0x1] %v224
          %v226 = vld [vmem:[#allocation2] sm:$0x1]
          %v227 = vadd.f32 %v226, 0.0
          %s228 = vtos %v227
          %s229 = smul.f32 %s228, 0.05
          %v230 = vld [vmem:[#allocation3] sm:$0x1]
          %v231 = vmul.f32 %v230, 0.05
          %vm232 = vcmask 1040384
          %v233 = vsel %vm232, %v231, -inf
          %234 = vmax.xlane.f32.xlu0 %v233
          %v235 = vpop.xlane.xlu0 %234
          %v236 = vsub.f32 %v231, %v235
          %v237 = vmul.f32 %v236, 1.442695
          %v238 = vpow.pop %v237
          %v239 = vsel %vm232, %v238, 0.0
          %240 = vadd.xlane.f32.xlu0 %v239
          %v241 = vpop.xlane.xlu0 %240
          %v242 = vmul.f32 %v238, %v236
          %v243 = vsel %vm232, %v242, 0.0
          %244 = vadd.xlane.f32.xlu0 %v243
          %v245 = vpop.xlane.xlu0 %244
          %v246 = vrcp.pop %v241
          %v247 = vmul.f32 %v245, %v246
          %v248 = vlog2.pop %v241
          %v249 = vmul.f32 %v248, 0.6931472
          %v250 = vsub.f32 %v247, %v249
          %v251 = vadd.f32 %v250, 0.0
          %s252 = vtos %v251
          %s253 = scalar_lea.smem [#allocation7], 0
          %254 = sst [smem:[%s253]] %s229
          %s255 = scalar_lea.smem [#allocation7], 1
          %256 = sst [smem:[%s255]] %s252
        $region40: #{tpu_custom_call.1} parent=23 // pred_fallthru
          _
        // Predicated region
        $region41: #{tpu_custom_call.1} parent=23 // pred_check
          %p257 = pneg %p55
        $region42: #{tpu_custom_call.1} parent=23 // pred_check_branch
          %259 = sbr.rel (%p257) target = $region44
        $region43: #{tpu_custom_call.1} parent=23 // pred_region
          %s261 = ssub.s32 16, 16
          %262 = vsyncadd [#allocation6], %s261
          %265 = dma.smem_to_hbm [#allocation7], 16, %s1, [#allocation6]
        $region44: #{tpu_custom_call.1} parent=23 // pred_fallthru
          _
        // Predicated region
        $region45: #{tpu_custom_call.1} parent=23 // pred_check
          %p266 = pneg %p55
        $region46: #{tpu_custom_call.1} parent=23 // pred_check_branch
          %268 = sbr.rel (%p266) target = $region48
        $region47: #{tpu_custom_call.1} parent=23 // pred_region
          %269 = dma.done [#allocation6], 16
        $region48: #{tpu_custom_call.1} parent=23 // pred_fallthru
          _
        %270 = sfence
      $region24: #{tpu_custom_call.1} parent=5 // pred_fallthru
        _
      %p271 = scmp.le.s32.totalorder 2, %s11
      // Predicated region
      $region49: #{tpu_custom_call.1} parent=5 // pred_check
        %p272 = pneg %p271
      $region50: #{tpu_custom_call.1} parent=5 // pred_check_branch
        %274 = sbr.rel (%p272) target = $region52
      $region51: #{tpu_custom_call.1} parent=5 // pred_region
        %s275 = ssub.s32 %s11, 2
      $region52: #{tpu_custom_call.1} parent=5 // pred_fallthru
        _
    $region6: #{tpu_custom_call.1} parent=1 // loop_footer
      %s15 = sadd.s32 1, %s11
    $region7: #{tpu_custom_call.1} parent=1 // loop_footer_branch
      %10 = sbr.rel target = $region3
    $region8: #{tpu_custom_call.1} parent=1 // loop_exit
      _
    %276 = vsyncpa [#allocation5], 1
    %s277 = scalar_lea.sflag [#allocation5], 1
    %278 = vsyncpa %s277, 1
    %279 = vsyncpa [#allocation6], 1
    %s280 = scalar_lea.sflag [#allocation6], 1
    %281 = vsyncpa %s280, 1

</llo_original>
